<compile_context>
chip_gen: v5e
topology: v5e:2x2
jax: 0.10.0
libtpu: 0.0.40
codegen_flags: <defaults>
</compile_context>

<pallas_src>
import jax
import jax.numpy as jnp
from jax.experimental import pallas as pl
from jax.experimental.pallas import tpu as pltpu

_LANE = 128  # full vreg lane width; minimal alignment => minimal tail/copies


def _cdiv(a, b):
    return -(-a // b)


def _chip_defaults():
    """Per-TPU-generation tiling defaults (block rows, TC split, VMEM limit)."""
    kind = ""
    try:
        kind = jax.devices()[0].device_kind.lower()
    except Exception:  # pragma: no cover - interpret/CPU fallback
        pass
    if "v7" in kind:
        # v7x: 64 MiB VMEM per TensorCore, 2 TCs sharing 3.2 TB/s HBM.
        # 4 MiB blocks x 2 inputs x 2 buffers = 16 MiB << 32 MiB limit.
        return dict(max_row_tile=8192, n_splits=2, vmem_limit=32 * 1024 * 1024)
    if "v4" in kind:
        # v4 megacore also exposes two TensorCores behind one device.
        return dict(max_row_tile=8192, n_splits=2, vmem_limit=64 * 1024 * 1024)
    # v5e / v6e (single TensorCore, 128 MiB VMEM): 8 MiB blocks, no split.
    return dict(max_row_tile=16384, n_splits=1, vmem_limit=64 * 1024 * 1024)


def _make_kernel(rows, row_tile, lane, steps_per_split, need_mask):
    groups = row_tile // 8  # row_tile is always a multiple of 8 on this path

    def kernel(pred_ref, gt_ref, out_ref, acc_ref):
        i = pl.program_id(0)   # TensorCore split axis ("parallel")
        j = pl.program_id(1)   # streaming/reduction axis ("arbitrary")

        @pl.when(j == 0)
        def _init():
            acc_ref[...] = jnp.zeros_like(acc_ref)

        pred = pred_ref[...].astype(jnp.float32)
        gt = gt_ref[...].astype(jnp.float32)
        # TODO(synk): PyTorch reference does not clamp, so log(pred) is left
        # unclamped (pred that underflows to 0.0 gives -inf/NaN, matching torch).
        prod = gt * jnp.log(pred)

        def _accumulate(vals):
            # Layout-free sublane split + pure-VPU reduction into a small
            # (8, lane) resident accumulator (no full-tile RMW per step).
            acc_ref[...] += vals.reshape(groups, 8, lane).sum(axis=0)

        if need_mask:
            base = (i * steps_per_split + j) * row_tile
            is_partial = base + row_tile > rows

            @pl.when(jnp.logical_not(is_partial))
            def _full_tile():
                _accumulate(prod)

            @pl.when(is_partial)
            def _partial_tile():
                # Mask the *product*, not just gt: rows past the end of the
                # data hold garbage, and log(garbage) may be NaN/-inf.
                r = jax.lax.broadcasted_iota(jnp.int32, (row_tile, lane), 0)
                _accumulate(jnp.where(base + r < rows, prod, 0.0))
        else:
            _accumulate(prod)

        @pl.when(j == pl.num_programs(1) - 1)
        def _finalize():
            # One cross-lane (XLU) reduction + negation + (1,1) store per split.
            out_ref[...] = -jnp.sum(acc_ref[...], axis=(0, 1), keepdims=True)

    return kernel


def listnet_loss(predictions, ground_truth_probs, *, max_row_tile=None,
                 n_splits=None, vmem_limit_bytes=None):
    """ListNet loss = -sum(gt * log(pred)) via a streaming Pallas TPU kernel."""
    assert predictions.shape == ground_truth_probs.shape

    cfg = _chip_defaults()
    if max_row_tile is None:
        max_row_tile = cfg["max_row_tile"]
    if n_splits is None:
        n_splits = cfg["n_splits"]
    if vmem_limit_bytes is None:
        vmem_limit_bytes = cfg["vmem_limit"]
    max_row_tile = max(8, (max_row_tile // 8) * 8)

    lane = _LANE
    total = int(predictions.size)
    pred_flat = predictions.reshape(-1)
    gt_flat = ground_truth_probs.reshape(-1)

    rows = total // lane
    tail = total - rows * lane

    if rows < 8:
        # Too small for one (8,128)-aligned tile: plain JAX is both correct and
        # cheaper than a kernel launch.
        return -jnp.sum(gt_flat.astype(jnp.float32)
                        * jnp.log(pred_flat.astype(jnp.float32)))

    loss = jnp.zeros((), jnp.float32)
    if tail > 0:
        # <128 leftover elements: tiny plain-JAX sum (no full-array pad/copy).
        pt = pred_flat[rows * lane:].astype(jnp.float32)
        gtt = gt_flat[rows * lane:].astype(jnp.float32)
        loss = loss - jnp.sum(gtt * jnp.log(pt))
        pred_flat = pred_flat[: rows * lane]
        gt_flat = gt_flat[: rows * lane]

    pred2d = pred_flat.reshape(rows, lane)   # copy-free for contiguous inputs
    gt2d = gt_flat.reshape(rows, lane)

    row_tile = min(max_row_tile, (rows // 8) * 8)
    steps_total = _cdiv(rows, row_tile)
    n_splits = max(1, min(n_splits, steps_total))
    steps_per_split = _cdiv(steps_total, n_splits)
    need_clamp = n_splits * steps_per_split != steps_total
    need_mask = (rows % row_tile != 0) or need_clamp

    def in_idx(i, j):
        blk = i * steps_per_split + j
        if need_clamp:
            # Overflow tiles of the last split re-read a valid block; the
            # in-kernel mask zeroes their contribution.
            blk = jnp.minimum(blk, steps_total - 1)
        return (blk, 0)

    kernel = _make_kernel(rows, row_tile, lane, steps_per_split, need_mask)

    partials = pl.pallas_call(
        kernel,
        out_shape=jax.ShapeDtypeStruct((n_splits, 1), jnp.float32),
        grid_spec=pltpu.PrefetchScalarGridSpec(
            num_scalar_prefetch=0,
            grid=(n_splits, steps_per_split),
            in_specs=[
                pl.BlockSpec((row_tile, lane), in_idx),
                pl.BlockSpec((row_tile, lane), in_idx),
            ],
            # One resident (1,1) partial per split; written only at finalize.
            out_specs=pl.BlockSpec((1, 1), lambda i, j: (i, 0)),
            scratch_shapes=[pltpu.VMEM((8, lane), jnp.float32)],
        ),
        compiler_params=pltpu.CompilerParams(
            # TODO(synk): verify on v7x (xprof/bundle dump) that the "parallel"
            # split axis is actually sharded across both TensorCores; if not,
            # switch axis 0 to pltpu.CORE_PARALLEL.
            dimension_semantics=("parallel", "arbitrary"),
            vmem_limit_bytes=vmem_limit_bytes,
        ),
    )(pred2d, gt2d)

    return loss + jnp.sum(partials)


def listnet_loss_ref(predictions, ground_truth_probs):
    """Plain-JAX reference matching the PyTorch forward exactly."""
    return -jnp.sum(ground_truth_probs.astype(jnp.float32)
                    * jnp.log(predictions.astype(jnp.float32)))


if __name__ == "__main__":
    key = jax.random.PRNGKey(0)
    k1, k2, k3, k4 = jax.random.split(key, 4)

    # Primary check: 16 ranking lists of 128 items each (valid probability
    # distributions via softmax, the ListNet assumption).  Fully lane-aligned:
    # copy-free path, no in-kernel masking.
    num_lists, list_size = 16, 128
    predictions = jax.nn.softmax(
        jax.random.normal(k1, (num_lists, list_size), dtype=jnp.float32), axis=-1)
    ground_truth_probs = jax.nn.softmax(
        jax.random.normal(k2, (num_lists, list_size), dtype=jnp.float32), axis=-1)

    loss = jax.block_until_ready(listnet_loss(predictions, ground_truth_probs))
    ref = jax.block_until_ready(listnet_loss_ref(predictions, ground_truth_probs))
    assert jnp.allclose(loss, ref, rtol=1e-5, atol=1e-4), (loss, ref)

    # Secondary check: non-aligned size — exercises the in-kernel partial-tile
    # mask and the tiny plain-JAX tail path.
    preds2 = jax.nn.softmax(jax.random.normal(k3, (5, 250), dtype=jnp.float32), axis=-1)
    gts2 = jax.nn.softmax(jax.random.normal(k4, (5, 250), dtype=jnp.float32), axis=-1)
    loss2 = jax.block_until_ready(listnet_loss(preds2, gts2))
    ref2 = jax.block_until_ready(listnet_loss_ref(preds2, gts2))
    assert jnp.allclose(loss2, ref2, rtol=1e-5, atol=1e-4), (loss2, ref2)

    print("KERNEL_OK")
</pallas_src>

<mosaic_0001>
module attributes {stable_mosaic.version = 11 : i64} {
  func.func @kernel(%arg0: i32, %arg1: i32, %arg2: memref<16x128xf32, #tpu.memory_space<vmem>>, %arg3: memref<16x128xf32, #tpu.memory_space<vmem>>, %arg4: memref<1x1xf32, #tpu.memory_space<vmem>>, %arg5: memref<8x128xf32, #tpu.memory_space<vmem>>) attributes {dimension_semantics = [#tpu.dimension_semantics<parallel>, #tpu.dimension_semantics<arbitrary>], iteration_bounds = array<i64: 1, 1>, scalar_prefetch = 0 : i64, scratch_operands = 1 : i64, tpu.core_type = #tpu.core_type<tc>, window_params = [{transform_indices = @transform_0, window_bounds = array<i64: 16, 128>}, {transform_indices = @transform_1, window_bounds = array<i64: 16, 128>}, {transform_indices = @transform_2, window_bounds = array<i64: 1, 1>}]} {
    %c0_i32 = arith.constant 0 : i32
    %0 = arith.cmpi eq, %arg1, %c0_i32 : i32
    %1 = arith.extui %0 : i1 to i32
    %c0_i32_0 = arith.constant 0 : i32
    %2 = arith.cmpi ne, %1, %c0_i32_0 : i32
    scf.if %2 {
      %cst_10 = arith.constant 0.000000e+00 : f32
      %15 = vector.broadcast %cst_10 : f32 to vector<8x128xf32>
      %c0_11 = arith.constant 0 : index
      %c0_12 = arith.constant 0 : index
      %16 = vector.load %arg5[%c0_11, %c0_12] : memref<8x128xf32, #tpu.memory_space<vmem>>, vector<8x128xf32>
      tpu.vector_store %arg5[%c0_11, %c0_12], %15 {strides = array<i32>} : memref<8x128xf32, #tpu.memory_space<vmem>>, vector<8x128xf32>,
    } else {
    }
    %c0 = arith.constant 0 : index
    %c0_1 = arith.constant 0 : index
    %3 = vector.load %arg2[%c0, %c0_1] : memref<16x128xf32, #tpu.memory_space<vmem>>, vector<16x128xf32>
    %c0_2 = arith.constant 0 : index
    %c0_3 = arith.constant 0 : index
    %4 = vector.load %arg3[%c0_2, %c0_3] : memref<16x128xf32, #tpu.memory_space<vmem>>, vector<16x128xf32>
    %5 = math.log %3 : vector<16x128xf32>
    %6 = arith.mulf %4, %5 : vector<16x128xf32>
    %c0_4 = arith.constant 0 : index
    %c0_5 = arith.constant 0 : index
    %7 = vector.load %arg5[%c0_4, %c0_5] : memref<8x128xf32, #tpu.memory_space<vmem>>, vector<8x128xf32>
    %8 = vector.shape_cast %6 : vector<16x128xf32> to vector<2x8x128xf32>
    %cst = arith.constant dense<0.000000e+00> : vector<8x128xf32>
    %9 = vector.multi_reduction <add>, %8, %cst [0] : vector<2x8x128xf32> to vector<8x128xf32>
    %10 = arith.addf %7, %9 : vector<8x128xf32>
    %c0_6 = arith.constant 0 : index
    %c0_7 = arith.constant 0 : index
    %11 = vector.load %arg5[%c0_6, %c0_7] : memref<8x128xf32, #tpu.memory_space<vmem>>, vector<8x128xf32>
    tpu.vector_store %arg5[%c0_6, %c0_7], %10 {strides = array<i32>} : memref<8x128xf32, #tpu.memory_space<vmem>>, vector<8x128xf32>,
    %c0_i32_8 = arith.constant 0 : i32
    %12 = arith.cmpi eq, %arg1, %c0_i32_8 : i32
    %13 = arith.extui %12 : i1 to i32
    %c0_i32_9 = arith.constant 0 : i32
    %14 = arith.cmpi ne, %13, %c0_i32_9 : i32
    scf.if %14 {
      %c0_10 = arith.constant 0 : index
      %c0_11 = arith.constant 0 : index
      %15 = vector.load %arg5[%c0_10, %c0_11] : memref<8x128xf32, #tpu.memory_space<vmem>>, vector<8x128xf32>
      %16 = vector.shape_cast %15 : vector<8x128xf32> to vector<1x8x128xf32>
      %cst_12 = arith.constant dense<0.000000e+00> : vector<1xf32>
      %17 = vector.multi_reduction <add>, %16, %cst_12 [1, 2] : vector<1x8x128xf32> to vector<1xf32>
      %18 = vector.shape_cast %17 : vector<1xf32> to vector<1x1x1xf32>
      %19 = vector.extract %18[0, 0, 0] : f32 from vector<1x1x1xf32>
      %20 = vector.broadcast %19 : f32 to vector<1x1xf32>
      %cst_13 = arith.constant 0.000000e+00 : f32
      %21 = vector.broadcast %cst_13 : f32 to vector<1x1xf32>
      %22 = arith.subf %21, %20 : vector<1x1xf32>
      %c0_14 = arith.constant 0 : index
      %c0_15 = arith.constant 0 : index
      %23 = vector.load %arg4[%c0_14, %c0_15] : memref<1x1xf32, #tpu.memory_space<vmem>>, vector<1x1xf32>
      tpu.vector_store %arg4[%c0_14, %c0_15], %22 {strides = array<i32>} : memref<1x1xf32, #tpu.memory_space<vmem>>, vector<1x1xf32>,
    } else {
    }
    return
  }
  func.func @transform_0(%arg0: i32, %arg1: i32) -> (i32, i32) {
    %c1_i32 = arith.constant 1 : i32
    %0 = arith.muli %arg0, %c1_i32 : i32
    %1 = arith.addi %0, %arg1 : i32
    %c0_i32 = arith.constant 0 : i32
    %c0_i32_0 = arith.constant 0 : i32
    return %1, %c0_i32 : i32, i32
  }
  func.func @transform_1(%arg0: i32, %arg1: i32) -> (i32, i32) {
    %c1_i32 = arith.constant 1 : i32
    %0 = arith.muli %arg0, %c1_i32 : i32
    %1 = arith.addi %0, %arg1 : i32
    %c0_i32 = arith.constant 0 : i32
    %c0_i32_0 = arith.constant 0 : i32
    return %1, %c0_i32 : i32, i32
  }
  func.func @transform_2(%arg0: i32, %arg1: i32) -> (i32, i32) {
    %c0_i32 = arith.constant 0 : i32
    %c0_i32_0 = arith.constant 0 : i32
    return %arg0, %c0_i32 : i32, i32
  }
}

</mosaic_0001>

<llo_original>
// kernel: tpu_custom_call.1
$region0: #{tpu_custom_call.1}
  #allocation0 [shape = 'u32[]', space=smem, size = 0x4, offset = 0x4, fixed_abs, tag = 'smem constant byte address 0x4 - core index']
  #allocation1 [shape = 'u32[72,128]{1,0:T(1,128)}', space=vmem, size = 0x9000, scoped, tag = 'internal scratch']
  #allocation2 [shape = 'f32[8,128]{1,0:T(8,128)}', space=vmem, size = 0x1000, scoped, tag = 'scratch operand']
  %s0 = inlined_call_operand.hbm [shape: f32[16,128], index: 0, kind: input, shape index: {}]
  %s1 = inlined_call_operand.hbm [shape: f32[16,128], index: 1, kind: input, shape index: {}]
  %s2 = inlined_call_operand.hbm [shape: f32[1,1], index: 2, kind: output, shape index: {}]
  %s3 = sld [smem:[#allocation0]]
  $region34: #{tpu_custom_call.1} parent=0
    _
  %s5 = ssub.s32 1, %s3
  %s6 = scalar_select 0, %s5, %s3
  $region1: #{tpu_custom_call.1} parent=0
    #allocation3 [shape = 'u8[8192]{0}', space=vmem, size = 0x2000, scoped, tag = 'input window, operand 0, single buffered']
    #allocation4 [shape = 's32[1]{0}', space=sflag, size = 0x4, scoped, tag = 'scoped memory for tpu_custom_call.1']
    #allocation5 [shape = 's32[1]{0}', space=sflag, size = 0x4, scoped, tag = 'scoped memory for tpu_custom_call.1']
    #allocation6 [shape = 'u8[8192]{0}', space=vmem, size = 0x2000, scoped, tag = 'input window, operand 1, single buffered']
    #allocation7 [shape = 's32[1]{0}', space=sflag, size = 0x4, scoped, tag = 'scoped memory for tpu_custom_call.1']
    #allocation8 [shape = 'u8[512]{0}', space=vmem, size = 0x400, scoped, tag = 'output window, operand 0, single buffered']
    %7 = vsyncpa [#allocation4], 0
    %8 = vsyncpa [#allocation7], 0
    %9 = vsyncpa [#allocation5], 0
    // Predicated region
    $region2: #{tpu_custom_call.1} parent=1 // pred_check
      _
    $region3: #{tpu_custom_call.1} parent=1 // pred_check_branch
      %11 = sbr.rel (0) target = $region5
    $region4: #{tpu_custom_call.1} parent=1 // pred_region
      %s12 = sadd.s32 0, 0
      %s13 = smul.u32 2, %s12
      %15 = vsyncadd [#allocation4], 0
      %s16 = smul.addr %s13, 8
      %s17 = scalar_lea.hbm %s0, %s16
      %s18 = sshll.u32 %s17, 4
      %s19 = int_to_ptr.hbm [resolvable:$true] %s18
      %s20 = sshll.u32 [#allocation3], 4
      %s21 = int_to_ptr.vmem [resolvable:$true] %s20
      %26 = dma.hbm_to_vmem [thread:$0]  %s19, 256, %s21, [#allocation4], 128, 128, 8
    $region5: #{tpu_custom_call.1} parent=1 // pred_fallthru
      _
    // Predicated region
    $region6: #{tpu_custom_call.1} parent=1 // pred_check
      _
    $region7: #{tpu_custom_call.1} parent=1 // pred_check_branch
      %28 = sbr.rel (0) target = $region9
    $region8: #{tpu_custom_call.1} parent=1 // pred_region
      %s29 = sadd.s32 0, 0
      %s30 = smul.u32 2, %s29
      %32 = vsyncadd [#allocation7], 0
      %s33 = smul.addr %s30, 8
      %s34 = scalar_lea.hbm %s1, %s33
      %s35 = sshll.u32 %s34, 4
      %s36 = int_to_ptr.hbm [resolvable:$true] %s35
      %s37 = sshll.u32 [#allocation6], 4
      %s38 = int_to_ptr.vmem [resolvable:$true] %s37
      %43 = dma.hbm_to_vmem [thread:$0]  %s36, 256, %s38, [#allocation7], 128, 128, 8
    $region9: #{tpu_custom_call.1} parent=1 // pred_fallthru
      _
    // Predicated region
    $region10: #{tpu_custom_call.1} parent=1 // pred_check
      _
    $region11: #{tpu_custom_call.1} parent=1 // pred_check_branch
      %45 = sbr.rel (0) target = $region13
    $region12: #{tpu_custom_call.1} parent=1 // pred_region
      %47 = dma.done [#allocation4], 256
    $region13: #{tpu_custom_call.1} parent=1 // pred_fallthru
      _
    // Predicated region
    $region14: #{tpu_custom_call.1} parent=1 // pred_check
      _
    $region15: #{tpu_custom_call.1} parent=1 // pred_check_branch
      %49 = sbr.rel (0) target = $region17
    $region16: #{tpu_custom_call.1} parent=1 // pred_region
      %51 = dma.done [#allocation7], 256
    $region17: #{tpu_custom_call.1} parent=1 // pred_fallthru
      _
    %s52 = sadd.s32 0, 0
    %s53 = smul.u32 2, %s52
    %s54 = sadd.s32 0, 0
    %s55 = smul.u32 2, %s54
    %p56 = scmp.eq.s32.totalorder 0, 0
    // Predicated region
    $region18: #{tpu_custom_call.1} parent=1 // pred_check
      %p57 = pneg %p56
    $region19: #{tpu_custom_call.1} parent=1 // pred_check_branch
      %59 = sbr.rel (%p57) target = $region21
    $region20: #{tpu_custom_call.1} parent=1 // pred_region
      %60 = vst [vmem:[#allocation2] sm:$0xff] 0.0
    $region21: #{tpu_custom_call.1} parent=1 // pred_fallthru
      _
    %v61 = vld [vmem:[#allocation3] sm:$0xff]
    %v62 = vld [vmem:[#allocation3 + $0x8] sm:$0xff]
    %v63 = vld [vmem:[#allocation6] sm:$0xff]
    %v64 = vld [vmem:[#allocation6 + $0x8] sm:$0xff]
    %v65 = vlog2.pop %v61
    %v66 = vmul.f32 %v65, 0.6931472
    %v67 = vlog2.pop %v62
    %v68 = vmul.f32 %v67, 0.6931472
    %v69 = vmul.f32 %v63, %v66
    %v70 = vmul.f32 %v64, %v68
    %v71 = vld [vmem:[#allocation2] sm:$0xff]
    %v72 = vadd.f32 %v69, %v70
    %v73 = vadd.f32 %v71, %v72
    %74 = vst [vmem:[#allocation2] sm:$0xff] %v73
    // Predicated region
    $region22: #{tpu_custom_call.1} parent=1 // pred_check
      %p75 = pneg %p56
    $region23: #{tpu_custom_call.1} parent=1 // pred_check_branch
      %77 = sbr.rel (%p75) target = $region25
    $region24: #{tpu_custom_call.1} parent=1 // pred_region
      %v78 = vld [vmem:[#allocation2] sm:$0xff]
      %79 = vadd.xlane.f32.xlu0 %v78
      %v80 = vpop.xlane.xlu0 %79
      %v81 = vrot.slane %v80, 4
      %v82 = vadd.f32 %v80, %v81
      %v83 = vrot.slane %v82, 2
      %v84 = vadd.f32 %v82, %v83
      %v85 = vrot.slane %v84, 1
      %v86 = vadd.f32 %v84, %v85
      %s87 = vtos %v86
      %v88 = vstv %s87
      %v89 = vsub.f32 0.0, %v88
      %vm90 = vcmask 0
      %91 = vst.msk [vmem:[#allocation8] sm:$0x1] %vm90, %v89
    $region25: #{tpu_custom_call.1} parent=1 // pred_fallthru
      _
    // Predicated region
    $region26: #{tpu_custom_call.1} parent=1 // pred_check
      _
    $region27: #{tpu_custom_call.1} parent=1 // pred_check_branch
      %93 = sbr.rel (0) target = $region29
    $region28: #{tpu_custom_call.1} parent=1 // pred_region
      %95 = vsyncadd [#allocation5], 0
      %s97 = sshll.u32 [#allocation8], 4
      %s98 = int_to_ptr.vmem [resolvable:$true] %s97
      %s99 = sshll.u32 %s2, 4
      %s100 = int_to_ptr.hbm [resolvable:$true] %s99
      %102 = dma.vmem_to_hbm [thread:$0]  %s98, 16, %s100, [#allocation5]
    $region29: #{tpu_custom_call.1} parent=1 // pred_fallthru
      _
    // Predicated region
    $region30: #{tpu_custom_call.1} parent=1 // pred_check
      _
    $region31: #{tpu_custom_call.1} parent=1 // pred_check_branch
      %104 = sbr.rel (0) target = $region33
    $region32: #{tpu_custom_call.1} parent=1 // pred_region
      %106 = dma.done [#allocation5], 16
    $region33: #{tpu_custom_call.1} parent=1 // pred_fallthru
      _
    %107 = vsyncpa [#allocation4], 1
    %108 = vsyncpa [#allocation7], 1
    %109 = vsyncpa [#allocation5], 1

</llo_original>
